<compile_context>
chip_gen: v7x
topology: tpu7x:2x2x1
jax: 0.10.0
libtpu: 0.0.40
codegen_flags: <defaults>
</compile_context>

<pallas_src>
import functools
import math

import jax
import jax.numpy as jnp
import numpy as np
from jax.experimental import pallas as pl
from jax.experimental.pallas import tpu as pltpu


def _eca_kernel_size(in_channel: int, b: int = 1, gama: int = 2) -> int:
    k = int(abs((math.log(in_channel, 2) + b) / gama))
    if k % 2:
        return k
    return k + 1


def ecam_kernel(y_ref, w_ref, out_ref, *, ksize: int):
    # y_ref / out_ref: (TB, C, L) VMEM blocks;  w_ref: (ksize,) SMEM.
    y = y_ref[...]
    yf = y.astype(jnp.float32)
    tb, C, L = yf.shape
    pad = ksize // 2

    # AdaptiveAvgPool1d(1): mean over the length (lane) axis -> (TB, C).
    gap = jnp.mean(yf, axis=2)

    # Conv1d(1, 1, ksize, padding=ksize//2, bias=False) along the channel
    # axis: k shifted multiply-accumulates on the pooled vector (replaces the
    # old banded (C, C) matmul).  ksize is tiny and static.
    if pad > 0:
        zeros = jnp.zeros((tb, pad), jnp.float32)
        gp = jnp.concatenate([zeros, gap, zeros], axis=1)  # (TB, C + 2*pad)
    else:
        gp = gap
    conv = jnp.zeros((tb, C), jnp.float32)
    for j in range(ksize):
        conv = conv + w_ref[j] * gp[:, j:j + C]

    # Sigmoid (exp + reciprocal land on the EUP slot), then
    # atten * Y + Y == (atten + 1) * Y broadcast over L.
    atten = jax.nn.sigmoid(conv)                           # (TB, C)
    out_ref[...] = ((atten[:, :, None] + 1.0) * yf).astype(out_ref.dtype)


def _choose_batch_tile(B: int, C: int, L: int, itemsize: int,
                       target_block_bytes: int = 2 << 20) -> int:
    """Pick TB: block ~1-2 MiB, TB | B, and >= 2 grid steps when B >= 2."""
    per_batch = max(C * L * itemsize, 1)
    tb = max(1, min(B, target_block_bytes // per_batch))
    if B >= 2:
        tb = min(tb, max(1, B // 2))   # keep >= 2 grid steps (v7x: 2 TCs)
    while B % tb:
        tb -= 1
    return tb


def ecam_forward(y: jax.Array, w: jax.Array) -> jax.Array:
    """y: (B, C, L), w: (ksize,) Conv1d(1,1,ksize,bias=False) weight (flattened)."""
    B, C, L = y.shape
    ksize = int(w.shape[0])
    itemsize = jnp.dtype(y.dtype).itemsize
    tb = _choose_batch_tile(B, C, L, itemsize)
    # With tb*C*L*itemsize <= ~2 MiB, double-buffered in+out stays well under
    # the default scoped VMEM on v5e (16 MiB) / v6e / v7x (32 MiB).
    # TODO(synk): for C*L slabs too large for VMEM, switch to a two-stage
    # (gap-accumulate over L-tiles, then L-tiled scale) formulation.
    kernel = functools.partial(ecam_kernel, ksize=ksize)
    return pl.pallas_call(
        kernel,
        out_shape=jax.ShapeDtypeStruct((B, C, L), y.dtype),
        grid=(B // tb,),
        in_specs=[
            pl.BlockSpec((tb, C, L), lambda b: (b, 0, 0)),
            pl.BlockSpec(memory_space=pltpu.MemorySpace.SMEM),
        ],
        out_specs=pl.BlockSpec((tb, C, L), lambda b: (b, 0, 0)),
        compiler_params=pltpu.CompilerParams(dimension_semantics=("parallel",)),
    )(y, w)


def ecam_reference(y: jax.Array, w: jax.Array) -> jax.Array:
    """Pure-JAX reference of the PyTorch forward."""
    B, C, L = y.shape
    k = int(w.shape[0])
    pad = k // 2
    gap = jnp.mean(y.astype(jnp.float32), axis=-1)           # (B, C)
    gp = jnp.pad(gap, ((0, 0), (pad, pad)))                  # (B, C + 2*pad)
    conv = sum(w[j] * gp[:, j:j + C] for j in range(k))      # (B, C)
    atten = jax.nn.sigmoid(conv)[..., None]                  # (B, C, 1)
    return (atten * y + y).astype(y.dtype)


if __name__ == "__main__":
    B, C, L = 4, 16, 128
    ksize = _eca_kernel_size(C)          # C=16 -> kernel_size=3, padding=1

    key = jax.random.PRNGKey(0)
    ky, kw = jax.random.split(key)
    y = jax.random.normal(ky, (B, C, L), dtype=jnp.float32)
    # Conv1d(1, 1, ksize, bias=False) weight has shape (1, 1, ksize); flatten.
    w = (jax.random.normal(kw, (ksize,), dtype=jnp.float32)
         * (1.0 / math.sqrt(ksize)))

    out = ecam_forward(y, w)
    jax.block_until_ready(out)

    ref = ecam_reference(y, w)
    np.testing.assert_allclose(np.asarray(out), np.asarray(ref),
                               rtol=1e-5, atol=1e-5)
    print("KERNEL_OK")
</pallas_src>

<mosaic_0001>
module attributes {stable_mosaic.version = 11 : i64} {
  func.func @ecam_kernel(%arg0: i32, %arg1: memref<2x16x128xf32, #tpu.memory_space<vmem>>, %arg2: memref<3xf32, #tpu.memory_space<smem>>, %arg3: memref<2x16x128xf32, #tpu.memory_space<vmem>>) attributes {dimension_semantics = [#tpu.dimension_semantics<parallel>], iteration_bounds = array<i64: 2>, scalar_prefetch = 0 : i64, scratch_operands = 0 : i64, tpu.core_type = #tpu.core_type<tc>, window_params = [{transform_indices = @transform_0, window_bounds = array<i64: 2, 16, 128>}, {transform_indices = @transform_1, window_bounds = array<i64: 3>}, {transform_indices = @transform_2, window_bounds = array<i64: 2, 16, 128>}]} {
    %c0 = arith.constant 0 : index
    %c0_0 = arith.constant 0 : index
    %c0_1 = arith.constant 0 : index
    %0 = vector.load %arg1[%c0, %c0_0, %c0_1] : memref<2x16x128xf32, #tpu.memory_space<vmem>>, vector<2x16x128xf32>
    %cst = arith.constant dense<0.000000e+00> : vector<2x16xf32>
    %1 = vector.multi_reduction <add>, %0, %cst [2] : vector<2x16x128xf32> to vector<2x16xf32>
    %cst_2 = arith.constant 1.280000e+02 : f32
    %2 = vector.broadcast %cst_2 : f32 to vector<2x16xf32>
    %3 = arith.divf %1, %2 : vector<2x16xf32>
    %cst_3 = arith.constant 0.000000e+00 : f32
    %4 = vector.broadcast %cst_3 : f32 to vector<2x1xf32>
    %5 = tpu.concatenate %4, %3, %4 in 1 : vector<2x1xf32>, vector<2x16xf32>, vector<2x1xf32> -> vector<2x18xf32>
    %cst_4 = arith.constant 0.000000e+00 : f32
    %6 = vector.broadcast %cst_4 : f32 to vector<2x16xf32>
    %c0_5 = arith.constant 0 : index
    %7 = memref.load %arg2[%c0_5] : memref<3xf32, #tpu.memory_space<smem>>
    %8 = vector.extract_strided_slice %5 {offsets = [0, 0], sizes = [2, 16], strides = [1, 1]} : vector<2x18xf32> to vector<2x16xf32>
    %9 = vector.broadcast %7 : f32 to vector<2x16xf32>
    %10 = arith.mulf %9, %8 : vector<2x16xf32>
    %11 = arith.addf %6, %10 : vector<2x16xf32>
    %c1 = arith.constant 1 : index
    %12 = memref.load %arg2[%c1] : memref<3xf32, #tpu.memory_space<smem>>
    %13 = vector.extract_strided_slice %5 {offsets = [0, 1], sizes = [2, 16], strides = [1, 1]} : vector<2x18xf32> to vector<2x16xf32>
    %14 = vector.broadcast %12 : f32 to vector<2x16xf32>
    %15 = arith.mulf %14, %13 : vector<2x16xf32>
    %16 = arith.addf %11, %15 : vector<2x16xf32>
    %c2 = arith.constant 2 : index
    %17 = memref.load %arg2[%c2] : memref<3xf32, #tpu.memory_space<smem>>
    %18 = vector.extract_strided_slice %5 {offsets = [0, 2], sizes = [2, 16], strides = [1, 1]} : vector<2x18xf32> to vector<2x16xf32>
    %19 = vector.broadcast %17 : f32 to vector<2x16xf32>
    %20 = arith.mulf %19, %18 : vector<2x16xf32>
    %21 = arith.addf %16, %20 : vector<2x16xf32>
    %22 = arith.negf %21 : vector<2x16xf32>
    %23 = math.exp %22 : vector<2x16xf32>
    %cst_6 = arith.constant 1.000000e+00 : f32
    %24 = vector.broadcast %cst_6 : f32 to vector<2x16xf32>
    %25 = arith.addf %24, %23 : vector<2x16xf32>
    %26 = arith.divf %24, %25 : vector<2x16xf32>
    %27 = vector.shape_cast %26 : vector<2x16xf32> to vector<2x16x1xf32>
    %cst_7 = arith.constant 1.000000e+00 : f32
    %28 = vector.broadcast %cst_7 : f32 to vector<2x16x1xf32>
    %29 = arith.addf %27, %28 : vector<2x16x1xf32>
    %30 = vector.broadcast %29 : vector<2x16x1xf32> to vector<2x16x128xf32>
    %31 = arith.mulf %30, %0 : vector<2x16x128xf32>
    %c0_8 = arith.constant 0 : index
    %c0_9 = arith.constant 0 : index
    %c0_10 = arith.constant 0 : index
    %32 = vector.load %arg3[%c0_8, %c0_9, %c0_10] : memref<2x16x128xf32, #tpu.memory_space<vmem>>, vector<2x16x128xf32>
    tpu.vector_store %arg3[%c0_8, %c0_9, %c0_10], %31 {strides = array<i32>} : memref<2x16x128xf32, #tpu.memory_space<vmem>>, vector<2x16x128xf32>,
    return
  }
  func.func @transform_0(%arg0: i32) -> (i32, i32, i32) {
    %c0_i32 = arith.constant 0 : i32
    %c0_i32_0 = arith.constant 0 : i32
    %c0_i32_1 = arith.constant 0 : i32
    return %arg0, %c0_i32, %c0_i32_0 : i32, i32, i32
  }
  func.func @transform_1(%arg0: i32) -> i32 {
    %c0_i32 = arith.constant 0 : i32
    %c0_i32_0 = arith.constant 0 : i32
    return %c0_i32 : i32
  }
  func.func @transform_2(%arg0: i32) -> (i32, i32, i32) {
    %c0_i32 = arith.constant 0 : i32
    %c0_i32_0 = arith.constant 0 : i32
    %c0_i32_1 = arith.constant 0 : i32
    return %arg0, %c0_i32, %c0_i32_0 : i32, i32, i32
  }
}

</mosaic_0001>

<llo_original>
// kernel: tpu_custom_call.1
$region0: #{tpu_custom_call.1}
  #allocation0 [shape = 'u32[]', space=smem, size = 0x4, offset = 0x4, fixed_abs, tag = 'smem constant byte address 0x4 - core index']
  #allocation1 [shape = 'u32[144,128]{1,0:T(1,128)}', space=vmem, size = 0x12000, scoped, tag = 'internal scratch']
  %s0 = inlined_call_operand.hbm [shape: f32[4,16,128], index: 0, kind: input, shape index: {}]
  %s1 = inlined_call_operand.vmem [shape: f32[3], index: 1, kind: input, shape index: {}]
  %s2 = inlined_call_operand.hbm [shape: f32[4,16,128], index: 2, kind: output, shape index: {}]
  %s3 = sld [smem:[#allocation0]]
  $region49: #{tpu_custom_call.1} parent=0
    _
  %s5 = ssub.s32 1, %s3
  %s6 = scalar_select 0, %s5, %s3
  $region1: #{tpu_custom_call.1} parent=0
    #allocation2 [shape = 'u8[32768]{0}', space=vmem, size = 0x8000, scoped, tag = 'input window, operand 0']
    #allocation3 [shape = 's32[2]{0}', space=sflag, size = 0x8, scoped, tag = 'scoped memory for tpu_custom_call.1']
    #allocation4 [shape = 's32[2]{0}', space=sflag, size = 0x8, scoped, tag = 'scoped memory for tpu_custom_call.1']
    #allocation5 [shape = 's32[2]{0}', space=sflag, size = 0x8, scoped, tag = 'scoped memory for tpu_custom_call.1']
    #allocation6 [shape = 'u8[512]{0}', space=smem, size = 0x200, scoped, tag = 'input window, operand 1, single buffered']
    #allocation7 [shape = 'u8[32768]{0}', space=vmem, size = 0x8000, scoped, tag = 'output window, operand 0']
    %7 = vsyncpa [#allocation3], 0
    %s8 = scalar_lea.sflag [#allocation3], 1
    %9 = vsyncpa %s8, 0
    %10 = vsyncpa [#allocation5], 0
    %11 = vsyncpa [#allocation4], 0
    %s12 = scalar_lea.sflag [#allocation4], 1
    %13 = vsyncpa %s12, 0
    loop: start=0, step=1, limit=4
    $region2: #{tpu_custom_call.1} parent=1 // loop_pre_header
      _
    $region3: #{tpu_custom_call.1} parent=1 // loop_header
      %s15 = sphi 0, %s19
      %p16 = scmp.ge.s32.totalorder %s15, 4
      %s25 = sphi 0, %s27
      %s28 = sphi 0, %s25
      %s29 = sphi 0, %s28
      %s45 = sphi 0, %s29
      %s49 = sphi 0, %s49
      %s51 = sphi 0, %s49
      %s52 = sphi 0, %s51
      %s66 = sphi 0, %s52
      %s72 = sphi 0, %s74
      %s75 = sphi 0, %s72
      %s76 = sphi 0, %s75
      %s92 = sphi 0, %s76
    $region4: #{tpu_custom_call.1} parent=1 // loop_header_branch
      %18 = sbr.rel (%p16) target = $region8
    $region5: #{tpu_custom_call.1} parent=1 // loop_body
      %s20 = ssub.s32 %s15, 1
      %s21 = ssub.s32 %s15, 2
      %s22 = sadd.s32 %s15, 1
      %s23 = ssub.s32 %s15, %s22
      %p24 = scmp.eq.s32.totalorder %s23, 0
      %s26 = sadd.s32 %s25, 1
      %s27 = scalar_select %p24, %s25, %s26
      %p30 = pneg %p24
      %p31 = scmp.eq.s32.totalorder %s15, 1
      %p32 = por %p30, %p31
      %p33 = scmp.ne.s32.totalorder %s25, %s28
      %p34 = scmp.eq.s32.totalorder %s15, 0
      %p35 = por %p33, %p34
      %p36 = scmp.ne.s32.totalorder %s25, %s28
      %p37 = scmp.eq.s32.totalorder %s20, 1
      %p38 = por %p36, %p37
      %p39 = scmp.ne.s32.totalorder %s28, %s29
      %p40 = scmp.eq.s32.totalorder %s20, 0
      %p41 = por %p39, %p40
      %p42 = scmp.ne.s32.totalorder %s28, %s29
      %p43 = scmp.eq.s32.totalorder %s21, 1
      %p44 = por %p42, %p43
      %p46 = scmp.ne.s32.totalorder %s29, %s45
      %p47 = scmp.eq.s32.totalorder %s21, 0
      %p48 = por %p46, %p47
      %s50 = sadd.s32 %s49, 1
      %p53 = scmp.eq.s32.totalorder %s15, 1
      %p54 = scmp.ne.s32.totalorder %s49, %s51
      %p55 = scmp.eq.s32.totalorder %s15, 0
      %p56 = por %p54, %p55
      %p57 = scmp.ne.s32.totalorder %s49, %s51
      %p58 = scmp.eq.s32.totalorder %s20, 1
      %p59 = por %p57, %p58
      %p60 = scmp.ne.s32.totalorder %s51, %s52
      %p61 = scmp.eq.s32.totalorder %s20, 0
      %p62 = por %p60, %p61
      %p63 = scmp.ne.s32.totalorder %s51, %s52
      %p64 = scmp.eq.s32.totalorder %s21, 1
      %p65 = por %p63, %p64
      %p67 = scmp.ne.s32.totalorder %s52, %s66
      %p68 = scmp.eq.s32.totalorder %s21, 0
      %p69 = por %p67, %p68
      %s70 = ssub.s32 %s15, %s22
      %p71 = scmp.eq.s32.totalorder %s70, 0
      %s73 = sadd.s32 %s72, 1
      %s74 = scalar_select %p71, %s72, %s73
      %p77 = pneg %p71
      %p78 = scmp.eq.s32.totalorder %s15, 1
      %p79 = por %p77, %p78
      %p80 = scmp.ne.s32.totalorder %s72, %s75
      %p81 = scmp.eq.s32.totalorder %s15, 0
      %p82 = por %p80, %p81
      %p83 = scmp.ne.s32.totalorder %s72, %s75
      %p84 = scmp.eq.s32.totalorder %s20, 1
      %p85 = por %p83, %p84
      %p86 = scmp.ne.s32.totalorder %s75, %s76
      %p87 = scmp.eq.s32.totalorder %s20, 0
      %p88 = por %p86, %p87
      %p89 = scmp.ne.s32.totalorder %s75, %s76
      %p90 = scmp.eq.s32.totalorder %s21, 1
      %p91 = por %p89, %p90
      %p93 = scmp.ne.s32.totalorder %s76, %s92
      %p94 = scmp.eq.s32.totalorder %s21, 0
      %p95 = por %p93, %p94
      %p96 = scmp.le.s32.totalorder 1, %s15
      %p97 = scmp.lt.s32.totalorder %s15, 3
      %p98 = pnand %p96, %p97
      %p99 = pneg %p98
      // Predicated region
      $region9: #{tpu_custom_call.1} parent=5 // pred_check
        _
      $region10: #{tpu_custom_call.1} parent=5 // pred_check_branch
        %101 = sbr.rel (%p98) target = $region12
      $region11: #{tpu_custom_call.1} parent=5 // pred_region
        %s102 = ssub.s32 %s15, 1
        // Predicated region
        $region13: #{tpu_custom_call.1} parent=11 // pred_check
          %p103 = pneg %p62
        $region14: #{tpu_custom_call.1} parent=11 // pred_check_branch
          %105 = sbr.rel (%p103) target = $region16
        $region15: #{tpu_custom_call.1} parent=11 // pred_region
          %s107 = ssub.s32 16, 16
          %108 = vsyncadd [#allocation5], %s107
          %s110 = sshll.u32 %s1, 4
          %s111 = int_to_ptr.vmem [resolvable:$true] %s110
          %113 = dma.vmem_to_smem %s111, 16, [#allocation6], [#allocation5]
        $region16: #{tpu_custom_call.1} parent=11 // pred_fallthru
          _
      $region12: #{tpu_custom_call.1} parent=5 // pred_fallthru
        _
      %p114 = scmp.lt.s32.totalorder %s15, 2
      // Predicated region
      $region17: #{tpu_custom_call.1} parent=5 // pred_check
        %p115 = pneg %p114
      $region18: #{tpu_custom_call.1} parent=5 // pred_check_branch
        %117 = sbr.rel (%p115) target = $region20
      $region19: #{tpu_custom_call.1} parent=5 // pred_region
        // Predicated region
        $region21: #{tpu_custom_call.1} parent=19 // pred_check
          %p118 = pneg %p35
        $region22: #{tpu_custom_call.1} parent=19 // pred_check_branch
          %120 = sbr.rel (%p118) target = $region24
        $region23: #{tpu_custom_call.1} parent=19 // pred_region
          %s121 = sand.u32 %s25, 1
          %s122 = scalar_lea.sflag [#allocation3], %s121
          %s123 = sand.u32 %s25, 1
          %s124 = smul.addr %s123, 32
          %s125 = scalar_lea.vmem [#allocation2], %s124
          %s126 = smul.u32 2, %s15
          %s128 = ssub.s32 512, 512
          %129 = vsyncadd %s122, %s128
          %s130 = smul.addr %s126, 2
          %s131 = smul.addr %s130, 128
          %s132 = scalar_lea.hbm %s0, %s131
          %s133 = sshll.u32 %s125, 4
          %s134 = int_to_ptr.vmem [resolvable:$true] %s133
          %139 = dma.hbm_to_vmem [thread:$0]  %s132, 512, %s134, %s122, 128, 128, 8
        $region24: #{tpu_custom_call.1} parent=19 // pred_fallthru
          _
      $region20: #{tpu_custom_call.1} parent=5 // pred_fallthru
        _
      %p140 = scmp.le.s32.totalorder 1, %s15
      %p141 = scmp.lt.s32.totalorder %s15, 3
      %p142 = pnand %p140, %p141
      %p143 = pneg %p142
      // Predicated region
      $region25: #{tpu_custom_call.1} parent=5 // pred_check
        _
      $region26: #{tpu_custom_call.1} parent=5 // pred_check_branch
        %145 = sbr.rel (%p142) target = $region28
      $region27: #{tpu_custom_call.1} parent=5 // pred_region
        %s146 = ssub.s32 %s15, 1
        %s147 = sand.u32 %s28, 1
        %s148 = scalar_lea.sflag [#allocation3], %s147
        %s149 = sand.u32 %s28, 1
        %s150 = smul.addr %s149, 32
        %s151 = scalar_lea.vmem [#allocation2], %s150
        // Predicated region
        $region29: #{tpu_custom_call.1} parent=27 // pred_check
          %p152 = pneg %p41
        $region30: #{tpu_custom_call.1} parent=27 // pred_check_branch
          %154 = sbr.rel (%p152) target = $region32
        $region31: #{tpu_custom_call.1} parent=27 // pred_region
          %155 = dma.done %s148, 512
        $region32: #{tpu_custom_call.1} parent=27 // pred_fallthru
          _
        // Predicated region
        $region33: #{tpu_custom_call.1} parent=27 // pred_check
          %p156 = pneg %p62
        $region34: #{tpu_custom_call.1} parent=27 // pred_check_branch
          %158 = sbr.rel (%p156) target = $region36
        $region35: #{tpu_custom_call.1} parent=27 // pred_region
          %159 = dma.done [#allocation5], 16
        $region36: #{tpu_custom_call.1} parent=27 // pred_fallthru
          _
        %160 = sfence
        %s161 = sand.u32 %s28, 1
        %s162 = scalar_lea.sflag [#allocation3], %s161
        %s163 = sand.u32 %s28, 1
        %s164 = smul.addr %s163, 32
        %s165 = scalar_lea.vmem [#allocation2], %s164
        %p166 = pneg %p41
        %p167 = pneg %p38
        %p168 = pneg %p62
        %p169 = pneg %p59
        %p170 = pneg %p88
        %p171 = pneg %p85
        %s172 = sand.u32 %s75, 1
        %s173 = scalar_lea.sflag [#allocation4], %s172
        %s174 = sand.u32 %s75, 1
        %s175 = smul.addr %s174, 32
        %s176 = scalar_lea.vmem [#allocation7], %s175
        %s177 = smul.u32 2, %s20
        %s178 = smul.u32 2, %s20
        %v179 = vld [vmem:[%s151] sm:$0xff]
        %v180 = vld [vmem:[%s151 + $0x8] sm:$0xff]
        %v181 = vld [vmem:[%s151 + $0x10] sm:$0xff]
        %v182 = vld [vmem:[%s151 + $0x18] sm:$0xff]
        %183 = vadd.xlane.f32.xlu0 %v179
        %v184 = vpop.xlane.xlu0 %183
        %185 = vadd.xlane.f32.xlu0 %v180
        %v186 = vpop.xlane.xlu0 %185
        %187 = vadd.xlane.f32.xlu0 %v181
        %v188 = vpop.xlane.xlu0 %187
        %189 = vadd.xlane.f32.xlu0 %v182
        %v190 = vpop.xlane.xlu0 %189
        %v191 = vrcp.pop 128.0
        %v192 = vmul.f32 %v184, %v191
        %v193 = vmul.f32 %v186, %v191
        %v194 = vmul.f32 %v188, %v191
        %v195 = vmul.f32 %v190, %v191
        %v200 = vlaneseq
        %v201 = vand.u32 %v200, 127
        %v202 = vadd.s32 %v201, 4294967295
        %v203 = vlaneseq
        %v204 = vshrl.u32 %v203, 7
        %v205 = vsub.s32 %v202, %v204
        %v206 = vrot.slane %v192, %v205
        %v207 = vadd.s32 %v201, 4294967287
        %v208 = vlaneseq
        %v209 = vshrl.u32 %v208, 7
        %v210 = vsub.s32 %v207, %v209
        %v211 = vrot.slane %v193, %v210
        %vm212 = vcmask 138312
        %v213 = vsel %vm212, %v211, %v206
        %v214 = vlaneseq
        %v215 = vshrl.u32 %v214, 7
        %v216 = vsub.s32 %v202, %v215
        %v217 = vrot.slane %v194, %v216
        %v218 = vlaneseq
        %v219 = vshrl.u32 %v218, 7
        %v220 = vsub.s32 %v207, %v219
        %v221 = vrot.slane %v195, %v220
        %v222 = vsel %vm212, %v221, %v217
        %vm223 = vcmask 1041409
        %v224 = vsel %vm223, %v222, %v213
        %vm226 = vcmask 7168
        %v227 = vsel %vm226, 0.0, %v224
        %vm228 = vcmask 138240
        %v229 = vsel %vm228, %v227, 0.0
        %s230 = sld [smem:[#allocation6]]
        %v231 = vstv %s230
        %v232 = vmul.f32 %v231, %v229
        %v233 = vadd.f32 %v232, 0.0
        %s234 = sld [smem:[#allocation6 + $0x1]]
        %v235 = vstv %s234
        %v236 = vmul.f32 %v235, %v229
        %238 = vrot.lane.b32.xlu0 %v236, 127
        %v239 = vpop.permute.xlu0 %238
        %v241 = vadd.f32 %v233, %v239
        %s242 = sld [smem:[#allocation6 + $0x2]]
        %v243 = vstv %s242
        %v244 = vmul.f32 %v243, %v229
        %246 = vrot.lane.b32.xlu0 %v244, 126
        %v247 = vpop.permute.xlu0 %246
        %v249 = vadd.f32 %v241, %v247
        %v250 = vxor.u32 %v249, 2147483648
        %v251 = vmul.f32 %v250, 1.442695
        %v252 = vpow.pop %v251
        %v253 = vadd.f32 %v252, 1.0
        %v254 = vrcp.pop %v253
        %v255 = vmul.f32 1.0, %v254
        %v256 = vlaneseq
        %v257 = vshrl.u32 %v256, 7
        %v258 = vsub.s32 0, %v257
        %v259 = vrot.slane %v255, %v258
        %261 = vbcast.lane.b32.xlu0 %v259, 256
        %v262 = vpop.permute.xlu0 %261
        %s264 = sor.u32 256, 8
        %265 = vbcast.lane.b32.xlu0 %v259, %s264
        %v266 = vpop.permute.xlu0 %265
        %v267 = vlaneseq
        %v268 = vshrl.u32 %v267, 7
        %v269 = vsub.s32 1, %v268
        %v270 = vrot.slane %v255, %v269
        %272 = vbcast.lane.b32.xlu0 %v270, 256
        %v273 = vpop.permute.xlu0 %272
        %s275 = sor.u32 256, 8
        %276 = vbcast.lane.b32.xlu0 %v270, %s275
        %v277 = vpop.permute.xlu0 %276
        %v278 = vadd.f32 %v262, 1.0
        %v279 = vadd.f32 %v266, 1.0
        %v280 = vadd.f32 %v273, 1.0
        %v281 = vadd.f32 %v277, 1.0
        %v282 = vmul.f32 %v278, %v179
        %v283 = vmul.f32 %v279, %v180
        %v284 = vmul.f32 %v280, %v181
        %v285 = vmul.f32 %v281, %v182
        %286 = vst [vmem:[%s176] sm:$0xff] %v282
        %287 = vst [vmem:[%s176 + $0x8] sm:$0xff] %v283
        %288 = vst [vmem:[%s176 + $0x10] sm:$0xff] %v284
        %289 = vst [vmem:[%s176 + $0x18] sm:$0xff] %v285
        %s290 = sand.u32 %s75, 1
        %s291 = scalar_lea.sflag [#allocation4], %s290
        %s292 = sand.u32 %s75, 1
        %s293 = smul.addr %s292, 32
        %s294 = scalar_lea.vmem [#allocation7], %s293
        // Predicated region
        $region37: #{tpu_custom_call.1} parent=27 // pred_check
          %p295 = pneg %p85
        $region38: #{tpu_custom_call.1} parent=27 // pred_check_branch
          %297 = sbr.rel (%p295) target = $region40
        $region39: #{tpu_custom_call.1} parent=27 // pred_region
          %s298 = smul.u32 2, %s20
          %s300 = ssub.s32 512, 512
          %301 = vsyncadd %s291, %s300
          %s302 = smul.addr %s298, 2
          %s303 = smul.addr %s302, 128
          %s304 = scalar_lea.hbm %s2, %s303
          %s305 = sshll.u32 %s294, 4
          %s306 = int_to_ptr.vmem [resolvable:$true] %s305
          %311 = dma.vmem_to_hbm [thread:$0]  %s306, 512, %s304, %s291, 128, 128, 8
        $region40: #{tpu_custom_call.1} parent=27 // pred_fallthru
          _
      $region28: #{tpu_custom_call.1} parent=5 // pred_fallthru
        _
      %p312 = scmp.le.s32.totalorder 2, %s15
      // Predicated region
      $region41: #{tpu_custom_call.1} parent=5 // pred_check
        %p313 = pneg %p312
      $region42: #{tpu_custom_call.1} parent=5 // pred_check_branch
        %315 = sbr.rel (%p313) target = $region44
      $region43: #{tpu_custom_call.1} parent=5 // pred_region
        %s316 = ssub.s32 %s15, 2
        // Predicated region
        $region45: #{tpu_custom_call.1} parent=43 // pred_check
          %p317 = pneg %p91
        $region46: #{tpu_custom_call.1} parent=43 // pred_check_branch
          %319 = sbr.rel (%p317) target = $region48
        $region47: #{tpu_custom_call.1} parent=43 // pred_region
          %s320 = sand.u32 %s76, 1
          %s321 = scalar_lea.sflag [#allocation4], %s320
          %s322 = sand.u32 %s76, 1
          %s323 = smul.addr %s322, 32
          %s324 = scalar_lea.vmem [#allocation7], %s323
          %325 = dma.done %s321, 512
        $region48: #{tpu_custom_call.1} parent=43 // pred_fallthru
          _
      $region44: #{tpu_custom_call.1} parent=5 // pred_fallthru
        _
    $region6: #{tpu_custom_call.1} parent=1 // loop_footer
      %s19 = sadd.s32 1, %s15
    $region7: #{tpu_custom_call.1} parent=1 // loop_footer_branch
      %14 = sbr.rel target = $region3
    $region8: #{tpu_custom_call.1} parent=1 // loop_exit
      _
    %326 = vsyncpa [#allocation3], 1
    %s327 = scalar_lea.sflag [#allocation3], 1
    %328 = vsyncpa %s327, 1
    %329 = vsyncpa [#allocation4], 1
    %s330 = scalar_lea.sflag [#allocation4], 1
    %331 = vsyncpa %s330, 1
    %332 = vsyncpa [#allocation5], 1
    %s333 = scalar_lea.sflag [#allocation5], 1
    %334 = vsyncpa %s333, 1

</llo_original>
